<compile_context>
chip_gen: v5e
topology: v5e:2x2
jax: 0.10.0
libtpu: 0.0.40
codegen_flags: <defaults>
</compile_context>

<pallas_src>
import functools

import jax
import jax.numpy as jnp
import numpy as np
from jax import lax
from jax.experimental import pallas as pl
from jax.experimental.pallas import tpu as pltpu

# ----------------------------- config ----------------------------------------
N_USERS = 8
N_ITEMS = 24
N_TOTAL = N_USERS + N_ITEMS
EMB_DIM = 32          # args_config.dim
DIR_HID = 384         # hard-coded dir_hidden_dim in CitationNN
N_HOPS = 2            # args_config.context_hops
ALPHA = 0.2           # args_config.alpha
DECAY = 1e-4          # args_config.l2
BATCH = 8
N_NEGS = 4

VMEM_SPEC = pl.BlockSpec(memory_space=pltpu.MemorySpace.VMEM)
SMEM_SPEC = pl.BlockSpec(memory_space=pltpu.MemorySpace.SMEM)


# ------------------------- fused forward kernel -------------------------------
def _citation_fused_kernel(adj_ref, a_cites_ref, a_citedby_ref,
                           user_emb_ref, item_emb_ref,
                           w_c_ref, b_c_ref, w_cb_ref, b_cb_ref,
                           wfc_top_ref, wfc_bot_ref, bfc_ref,
                           users_ref, pos_ref, neg_ref,
                           out_ref, all_emb_ref,
                           *, n_hops, alpha, decay, batch_size):
    f32 = jnp.float32
    ue = user_emb_ref[...]          # (N_USERS, EMB_DIM)
    ie = item_emb_ref[...]          # (N_ITEMS, EMB_DIM)
    adj = adj_ref[...]              # (N_TOTAL, N_TOTAL)

    # ---- LightGCN propagation + 'mean' pool (concat done in VMEM scratch) ----
    all_emb_ref[:N_USERS, :] = ue
    all_emb_ref[N_USERS:, :] = ie
    agg = jnp.dot(adj, all_emb_ref[...], preferred_element_type=f32)
    acc = agg
    for _ in range(n_hops - 1):
        agg = jnp.dot(adj, agg, preferred_element_type=f32)
        acc = acc + agg
    inv_pool = 1.0 / float(n_hops + 1)
    user_gcn = (ue + acc[:N_USERS, :]) * inv_pool    # (N_USERS, EMB_DIM)
    item_gcn = (ie + acc[N_USERS:, :]) * inv_pool    # (N_ITEMS, EMB_DIM)

    # ---- DirGCN: (A @ h) @ W  (DGL aggregate-first path, fewer FLOPs) -------
    h = item_gcn
    ah_c = jnp.dot(a_cites_ref[...], h, preferred_element_type=f32)      # (N_ITEMS, EMB_DIM)
    ah_cb = jnp.dot(a_citedby_ref[...], h, preferred_element_type=f32)   # (N_ITEMS, EMB_DIM)
    cites_msg = jnp.dot(ah_c, w_c_ref[...], preferred_element_type=f32) + b_c_ref[...]
    cited_msg = jnp.dot(ah_cb, w_cb_ref[...], preferred_element_type=f32) + b_cb_ref[...]
    # fc(cat([cites_msg, cited_msg], dim=1)) == cites@W_top + cited@W_bot + b
    fc = (jnp.dot(cites_msg, wfc_top_ref[...], preferred_element_type=f32)
          + jnp.dot(cited_msg, wfc_bot_ref[...], preferred_element_type=f32)
          + bfc_ref[...])
    dir_item = (1.0 - alpha) * fc + alpha * h        # (N_ITEMS, EMB_DIM)

    # ---- in-kernel batch gathers via one-hot matmuls on the MXU -------------
    u_ids = users_ref[...]          # (BATCH, 1) int32
    p_ids = pos_ref[...]            # (BATCH, 1) int32
    n_ids = neg_ref[...]            # (BATCH, 1) int32
    col_u = lax.broadcasted_iota(jnp.int32, (BATCH, N_USERS), 1)
    col_i = lax.broadcasted_iota(jnp.int32, (BATCH, N_ITEMS), 1)
    u_oh = (col_u == u_ids).astype(f32)              # (BATCH, N_USERS)
    p_oh = (col_i == p_ids).astype(f32)              # (BATCH, N_ITEMS)
    n_oh = (col_i == n_ids).astype(f32)              # (BATCH, N_ITEMS)

    u_e = jnp.dot(u_oh, user_gcn, preferred_element_type=f32)    # (BATCH, EMB_DIM)
    pos_e = jnp.dot(p_oh, dir_item, preferred_element_type=f32)
    neg_e = jnp.dot(n_oh, dir_item, preferred_element_type=f32)
    u_ego = jnp.dot(u_oh, ue, preferred_element_type=f32)
    p_ego = jnp.dot(p_oh, ie, preferred_element_type=f32)
    n_ego = jnp.dot(n_oh, ie, preferred_element_type=f32)

    # ---- BPR loss ------------------------------------------------------------
    pos_scores = jnp.sum(u_e * pos_e, axis=1, keepdims=True)      # (BATCH, 1)
    # torch broadcast (B,1,D)*(B,D) -> sum(-1) == u @ neg^T; contract last axes.
    neg_scores = lax.dot_general(u_e, neg_e, (((1,), (1,)), ((), ())),
                                 preferred_element_type=f32)      # (BATCH, BATCH)
    diff = neg_scores - pos_scores
    softplus = jnp.maximum(diff, 0.0) + jnp.log1p(jnp.exp(-jnp.abs(diff)))
    mf_loss = jnp.mean(softplus)
    reg = 0.5 * (jnp.sum(u_ego * u_ego) + jnp.sum(p_ego * p_ego)
                 + jnp.sum(n_ego * n_ego))
    emb_loss = decay * reg / batch_size
    out_ref[0] = mf_loss + emb_loss
    out_ref[1] = mf_loss
    out_ref[2] = emb_loss


def _cost_estimate():
    flops = 0
    flops += 2 * N_HOPS * N_TOTAL * N_TOTAL * EMB_DIM              # LightGCN hops
    flops += 2 * 2 * N_ITEMS * N_ITEMS * EMB_DIM                   # A @ h (both dirs)
    flops += 2 * 2 * N_ITEMS * EMB_DIM * DIR_HID                   # (Ah) @ W (both dirs)
    flops += 2 * 2 * N_ITEMS * DIR_HID * EMB_DIM                   # fc halves
    flops += 2 * BATCH * (2 * N_USERS + 4 * N_ITEMS) * EMB_DIM     # one-hot gathers
    flops += 2 * BATCH * BATCH * EMB_DIM + 4 * BATCH * EMB_DIM     # BPR scores
    bytes_accessed = 4 * (N_TOTAL * N_TOTAL + 2 * N_ITEMS * N_ITEMS
                          + N_USERS * EMB_DIM + N_ITEMS * EMB_DIM
                          + 2 * EMB_DIM * DIR_HID + 2 * DIR_HID
                          + 2 * DIR_HID * EMB_DIM + EMB_DIM
                          + 3 * BATCH + 3)
    return pl.CostEstimate(flops=flops,
                           transcendentals=2 * BATCH * BATCH,
                           bytes_accessed=bytes_accessed)


def citation_nn_forward(params, graphs, batch):
    # Only trivial index reshapes happen outside the kernel; all gathers,
    # concat, propagation, DirGCN and the loss run inside one pallas_call.
    users = batch["users"].astype(jnp.int32).reshape(BATCH, 1)
    pos = batch["pos_items"].astype(jnp.int32).reshape(BATCH, 1)
    neg = batch["neg_items"][:, :1].astype(jnp.int32)   # torch: [each[0] for each in neg_item]

    return pl.pallas_call(
        functools.partial(_citation_fused_kernel, n_hops=N_HOPS, alpha=ALPHA,
                          decay=DECAY, batch_size=float(BATCH)),
        out_shape=jax.ShapeDtypeStruct((3,), jnp.float32),
        in_specs=[VMEM_SPEC] * 15,
        out_specs=SMEM_SPEC,
        scratch_shapes=[pltpu.VMEM((N_TOTAL, EMB_DIM), jnp.float32)],
        cost_estimate=_cost_estimate(),
    )(graphs["norm_adj"], graphs["a_cites"], graphs["a_cited_by"],
      params["user_embed"], params["item_embed"],
      params["w_cites"], params["b_cites"],
      params["w_cited_by"], params["b_cited_by"],
      params["wfc_top"], params["wfc_bot"], params["b_fc"],
      users, pos, neg)


# ------------------------- pure-JAX reference ---------------------------------
def reference_forward(params, graphs, batch):
    hp = jax.lax.Precision.HIGHEST
    p = params
    all_embed = jnp.concatenate([p["user_embed"], p["item_embed"]], 0)
    agg = all_embed
    acc = all_embed
    for _ in range(N_HOPS):
        agg = jnp.dot(graphs["norm_adj"], agg, precision=hp)
        acc = acc + agg
    pooled = acc / (N_HOPS + 1)
    user_gcn, item_gcn = pooled[:N_USERS], pooled[N_USERS:]

    h = item_gcn
    cites = jnp.dot(graphs["a_cites"],
                    jnp.dot(h, p["w_cites"], precision=hp), precision=hp) + p["b_cites"]
    cited = jnp.dot(graphs["a_cited_by"],
                    jnp.dot(h, p["w_cited_by"], precision=hp), precision=hp) + p["b_cited_by"]
    hidden = jnp.concatenate([cites, cited], axis=1)
    wfc = jnp.concatenate([p["wfc_top"], p["wfc_bot"]], axis=0)
    fc = jnp.dot(hidden, wfc, precision=hp) + p["b_fc"]
    dir_item = (1.0 - ALPHA) * fc + ALPHA * h

    users = batch["users"]
    pos = batch["pos_items"]
    neg = batch["neg_items"][:, 0]
    u, pe, ne = user_gcn[users], dir_item[pos], dir_item[neg]
    pos_scores = jnp.sum(u * pe, axis=1)
    neg_scores = jnp.dot(u, ne.T, precision=hp)
    mf = jnp.mean(jnp.logaddexp(neg_scores - pos_scores[:, None], 0.0))
    ue, pe_e, ne_e = p["user_embed"][users], p["item_embed"][pos], p["item_embed"][neg]
    reg = (jnp.sum(ue ** 2) + jnp.sum(pe_e ** 2) + jnp.sum(ne_e ** 2)) / 2.0
    emb = DECAY * reg / users.shape[0]
    return jnp.stack([mf + emb, mf, emb])


# ------------------------- deterministic setup --------------------------------
def xavier_uniform(key, shape):
    fan_in, fan_out = shape[0], shape[1]
    bound = float(np.sqrt(6.0 / (fan_in + fan_out)))
    return jax.random.uniform(key, shape, jnp.float32, -bound, bound)


def build_everything(key):
    keys = jax.random.split(key, 12)
    params = {
        "user_embed": xavier_uniform(keys[0], (N_USERS, EMB_DIM)),
        "item_embed": xavier_uniform(keys[1], (N_ITEMS, EMB_DIM)),
        # DirGCN: cites_conv / cited_by_conv GraphConv weights (+ zero bias, DGL default)
        "w_cites": xavier_uniform(keys[2], (EMB_DIM, DIR_HID)),
        "b_cites": jnp.zeros((1, DIR_HID), jnp.float32),
        "w_cited_by": xavier_uniform(keys[3], (EMB_DIM, DIR_HID)),
        "b_cited_by": jnp.zeros((1, DIR_HID), jnp.float32),
        # fc: Linear(2*hidden -> in_dim), weight split into the cat halves
        "wfc_top": xavier_uniform(keys[4], (DIR_HID, EMB_DIM)),
        "wfc_bot": xavier_uniform(keys[5], (DIR_HID, EMB_DIM)),
        "b_fc": 0.01 * xavier_uniform(keys[6], (1, EMB_DIM)),
    }

    # Bipartite interaction graph -> symmetric-normalized dense adjacency
    R = (jax.random.uniform(keys[7], (N_USERS, N_ITEMS)) < 0.3).astype(jnp.float32)
    A = jnp.zeros((N_TOTAL, N_TOTAL), jnp.float32)
    A = A.at[:N_USERS, N_USERS:].set(R)
    A = A.at[N_USERS:, :N_USERS].set(R.T)
    deg = A.sum(1)
    d_inv_sqrt = jnp.where(deg > 0, 1.0 / jnp.sqrt(jnp.maximum(deg, 1e-12)), 0.0)
    norm_adj = d_inv_sqrt[:, None] * A * d_inv_sqrt[None, :]

    # Citation graph (row = dst, col = src), dense normalized adjacencies.
    C = (jax.random.uniform(keys[8], (N_ITEMS, N_ITEMS)) < 0.25).astype(jnp.float32)
    C = C * (1.0 - jnp.eye(N_ITEMS, dtype=jnp.float32))
    a_cites = C / jnp.maximum(C.sum(1, keepdims=True), 1.0)        # norm='right'
    M = C.T
    a_cited_by = M / jnp.maximum(M.sum(0, keepdims=True), 1.0)     # norm='left'

    graphs = {"norm_adj": norm_adj, "a_cites": a_cites, "a_cited_by": a_cited_by}

    batch = {
        "users": jax.random.randint(keys[9], (BATCH,), 0, N_USERS),
        "pos_items": jax.random.randint(keys[10], (BATCH,), 0, N_ITEMS),
        "neg_items": jax.random.randint(keys[11], (BATCH, N_NEGS), 0, N_ITEMS),
    }
    return params, graphs, batch


if __name__ == "__main__":
    key = jax.random.PRNGKey(0)
    params, graphs, batch = build_everything(key)

    losses = jax.block_until_ready(citation_nn_forward(params, graphs, batch))
    ref = jax.block_until_ready(reference_forward(params, graphs, batch))

    np.testing.assert_allclose(np.asarray(losses), np.asarray(ref),
                               rtol=2e-2, atol=2e-2)
    assert np.all(np.isfinite(np.asarray(losses)))
    print("KERNEL_OK")
</pallas_src>

<mosaic_0001>
module attributes {stable_mosaic.version = 11 : i64} {
  func.func @_citation_fused_kernel(%arg0: memref<32x32xf32, #tpu.memory_space<vmem>>, %arg1: memref<24x24xf32, #tpu.memory_space<vmem>>, %arg2: memref<24x24xf32, #tpu.memory_space<vmem>>, %arg3: memref<8x32xf32, #tpu.memory_space<vmem>>, %arg4: memref<24x32xf32, #tpu.memory_space<vmem>>, %arg5: memref<32x384xf32, #tpu.memory_space<vmem>>, %arg6: memref<1x384xf32, #tpu.memory_space<vmem>>, %arg7: memref<32x384xf32, #tpu.memory_space<vmem>>, %arg8: memref<1x384xf32, #tpu.memory_space<vmem>>, %arg9: memref<384x32xf32, #tpu.memory_space<vmem>>, %arg10: memref<384x32xf32, #tpu.memory_space<vmem>>, %arg11: memref<1x32xf32, #tpu.memory_space<vmem>>, %arg12: memref<8x1xi32, #tpu.memory_space<vmem>>, %arg13: memref<8x1xi32, #tpu.memory_space<vmem>>, %arg14: memref<8x1xi32, #tpu.memory_space<vmem>>, %arg15: memref<3xf32, #tpu.memory_space<smem>>, %arg16: memref<32x32xf32, #tpu.memory_space<vmem>>) attributes {dimension_semantics = [], scalar_prefetch = 0 : i64, scratch_operands = 1 : i64, tpu.core_type = #tpu.core_type<tc>} {
    %c0 = arith.constant 0 : index
    %c0_0 = arith.constant 0 : index
    %0 = vector.load %arg3[%c0, %c0_0] : memref<8x32xf32, #tpu.memory_space<vmem>>, vector<8x32xf32>
    %c0_1 = arith.constant 0 : index
    %c0_2 = arith.constant 0 : index
    %1 = vector.load %arg4[%c0_1, %c0_2] : memref<24x32xf32, #tpu.memory_space<vmem>>, vector<24x32xf32>
    %c0_3 = arith.constant 0 : index
    %c0_4 = arith.constant 0 : index
    %2 = vector.load %arg0[%c0_3, %c0_4] : memref<32x32xf32, #tpu.memory_space<vmem>>, vector<32x32xf32>
    %c0_5 = arith.constant 0 : index
    %c0_6 = arith.constant 0 : index
    %3 = vector.load %arg16[%c0_5, %c0_6] : memref<32x32xf32, #tpu.memory_space<vmem>>, vector<8x32xf32>
    tpu.vector_store %arg16[%c0_5, %c0_6], %0 {strides = array<i32>} : memref<32x32xf32, #tpu.memory_space<vmem>>, vector<8x32xf32>,
    %c8 = arith.constant 8 : index
    %c0_7 = arith.constant 0 : index
    %4 = vector.load %arg16[%c8, %c0_7] : memref<32x32xf32, #tpu.memory_space<vmem>>, vector<24x32xf32>
    tpu.vector_store %arg16[%c8, %c0_7], %1 {strides = array<i32>} : memref<32x32xf32, #tpu.memory_space<vmem>>, vector<24x32xf32>,
    %c0_8 = arith.constant 0 : index
    %c0_9 = arith.constant 0 : index
    %5 = vector.load %arg16[%c0_8, %c0_9] : memref<32x32xf32, #tpu.memory_space<vmem>>, vector<32x32xf32>
    %cst = arith.constant dense<0.000000e+00> : vector<32x32xf32>
    %6 = tpu.matmul %2, %5, %cst {dimension_numbers = #tpu.dot_dimension_numbers<[1], [0], [0], [1], [0, 0, 1, 1], [], []>} : vector<32x32xf32>, vector<32x32xf32>, vector<32x32xf32> -> vector<32x32xf32>
    %cst_10 = arith.constant dense<0.000000e+00> : vector<32x32xf32>
    %7 = tpu.matmul %2, %6, %cst_10 {dimension_numbers = #tpu.dot_dimension_numbers<[1], [0], [0], [1], [0, 0, 1, 1], [], []>} : vector<32x32xf32>, vector<32x32xf32>, vector<32x32xf32> -> vector<32x32xf32>
    %8 = arith.addf %6, %7 : vector<32x32xf32>
    %9 = vector.extract_strided_slice %8 {offsets = [0, 0], sizes = [8, 32], strides = [1, 1]} : vector<32x32xf32> to vector<8x32xf32>
    %10 = arith.addf %0, %9 : vector<8x32xf32>
    %cst_11 = arith.constant 0.333333343 : f32
    %11 = vector.broadcast %cst_11 : f32 to vector<8x32xf32>
    %12 = arith.mulf %10, %11 : vector<8x32xf32>
    %13 = vector.extract_strided_slice %8 {offsets = [8, 0], sizes = [24, 32], strides = [1, 1]} : vector<32x32xf32> to vector<24x32xf32>
    %14 = arith.addf %1, %13 : vector<24x32xf32>
    %cst_12 = arith.constant 0.333333343 : f32
    %15 = vector.broadcast %cst_12 : f32 to vector<24x32xf32>
    %16 = arith.mulf %14, %15 : vector<24x32xf32>
    %c0_13 = arith.constant 0 : index
    %c0_14 = arith.constant 0 : index
    %17 = vector.load %arg1[%c0_13, %c0_14] : memref<24x24xf32, #tpu.memory_space<vmem>>, vector<24x24xf32>
    %cst_15 = arith.constant dense<0.000000e+00> : vector<24x32xf32>
    %18 = tpu.matmul %17, %16, %cst_15 {dimension_numbers = #tpu.dot_dimension_numbers<[1], [0], [0], [1], [0, 0, 1, 1], [], []>} : vector<24x24xf32>, vector<24x32xf32>, vector<24x32xf32> -> vector<24x32xf32>
    %c0_16 = arith.constant 0 : index
    %c0_17 = arith.constant 0 : index
    %19 = vector.load %arg2[%c0_16, %c0_17] : memref<24x24xf32, #tpu.memory_space<vmem>>, vector<24x24xf32>
    %cst_18 = arith.constant dense<0.000000e+00> : vector<24x32xf32>
    %20 = tpu.matmul %19, %16, %cst_18 {dimension_numbers = #tpu.dot_dimension_numbers<[1], [0], [0], [1], [0, 0, 1, 1], [], []>} : vector<24x24xf32>, vector<24x32xf32>, vector<24x32xf32> -> vector<24x32xf32>
    %c0_19 = arith.constant 0 : index
    %c0_20 = arith.constant 0 : index
    %21 = vector.load %arg5[%c0_19, %c0_20] : memref<32x384xf32, #tpu.memory_space<vmem>>, vector<32x384xf32>
    %cst_21 = arith.constant dense<0.000000e+00> : vector<24x384xf32>
    %22 = tpu.matmul %18, %21, %cst_21 {dimension_numbers = #tpu.dot_dimension_numbers<[1], [0], [0], [1], [0, 0, 1, 1], [], []>} : vector<24x32xf32>, vector<32x384xf32>, vector<24x384xf32> -> vector<24x384xf32>
    %c0_22 = arith.constant 0 : index
    %c0_23 = arith.constant 0 : index
    %23 = vector.load %arg6[%c0_22, %c0_23] : memref<1x384xf32, #tpu.memory_space<vmem>>, vector<1x384xf32>
    %24 = vector.broadcast %23 : vector<1x384xf32> to vector<24x384xf32>
    %25 = arith.addf %22, %24 : vector<24x384xf32>
    %c0_24 = arith.constant 0 : index
    %c0_25 = arith.constant 0 : index
    %26 = vector.load %arg7[%c0_24, %c0_25] : memref<32x384xf32, #tpu.memory_space<vmem>>, vector<32x384xf32>
    %cst_26 = arith.constant dense<0.000000e+00> : vector<24x384xf32>
    %27 = tpu.matmul %20, %26, %cst_26 {dimension_numbers = #tpu.dot_dimension_numbers<[1], [0], [0], [1], [0, 0, 1, 1], [], []>} : vector<24x32xf32>, vector<32x384xf32>, vector<24x384xf32> -> vector<24x384xf32>
    %c0_27 = arith.constant 0 : index
    %c0_28 = arith.constant 0 : index
    %28 = vector.load %arg8[%c0_27, %c0_28] : memref<1x384xf32, #tpu.memory_space<vmem>>, vector<1x384xf32>
    %29 = vector.broadcast %28 : vector<1x384xf32> to vector<24x384xf32>
    %30 = arith.addf %27, %29 : vector<24x384xf32>
    %c0_29 = arith.constant 0 : index
    %c0_30 = arith.constant 0 : index
    %31 = vector.load %arg9[%c0_29, %c0_30] : memref<384x32xf32, #tpu.memory_space<vmem>>, vector<384x32xf32>
    %cst_31 = arith.constant dense<0.000000e+00> : vector<24x32xf32>
    %32 = tpu.matmul %25, %31, %cst_31 {dimension_numbers = #tpu.dot_dimension_numbers<[1], [0], [0], [1], [0, 0, 1, 1], [], []>} : vector<24x384xf32>, vector<384x32xf32>, vector<24x32xf32> -> vector<24x32xf32>
    %c0_32 = arith.constant 0 : index
    %c0_33 = arith.constant 0 : index
    %33 = vector.load %arg10[%c0_32, %c0_33] : memref<384x32xf32, #tpu.memory_space<vmem>>, vector<384x32xf32>
    %cst_34 = arith.constant dense<0.000000e+00> : vector<24x32xf32>
    %34 = tpu.matmul %30, %33, %cst_34 {dimension_numbers = #tpu.dot_dimension_numbers<[1], [0], [0], [1], [0, 0, 1, 1], [], []>} : vector<24x384xf32>, vector<384x32xf32>, vector<24x32xf32> -> vector<24x32xf32>
    %35 = arith.addf %32, %34 : vector<24x32xf32>
    %c0_35 = arith.constant 0 : index
    %c0_36 = arith.constant 0 : index
    %36 = vector.load %arg11[%c0_35, %c0_36] : memref<1x32xf32, #tpu.memory_space<vmem>>, vector<1x32xf32>
    %37 = vector.broadcast %36 : vector<1x32xf32> to vector<24x32xf32>
    %38 = arith.addf %35, %37 : vector<24x32xf32>
    %cst_37 = arith.constant 8.000000e-01 : f32
    %39 = vector.broadcast %cst_37 : f32 to vector<24x32xf32>
    %40 = arith.mulf %39, %38 : vector<24x32xf32>
    %cst_38 = arith.constant 2.000000e-01 : f32
    %41 = vector.broadcast %cst_38 : f32 to vector<24x32xf32>
    %42 = arith.mulf %41, %16 : vector<24x32xf32>
    %43 = arith.addf %40, %42 : vector<24x32xf32>
    %c0_39 = arith.constant 0 : index
    %c0_40 = arith.constant 0 : index
    %44 = vector.load %arg12[%c0_39, %c0_40] : memref<8x1xi32, #tpu.memory_space<vmem>>, vector<8x1xi32>
    %c0_41 = arith.constant 0 : index
    %c0_42 = arith.constant 0 : index
    %45 = vector.load %arg13[%c0_41, %c0_42] : memref<8x1xi32, #tpu.memory_space<vmem>>, vector<8x1xi32>
    %c0_43 = arith.constant 0 : index
    %c0_44 = arith.constant 0 : index
    %46 = vector.load %arg14[%c0_43, %c0_44] : memref<8x1xi32, #tpu.memory_space<vmem>>, vector<8x1xi32>
    %47 = tpu.iota {dimensions = array<i32: 1>} : vector<8x8xi32>
    %48 = tpu.iota {dimensions = array<i32: 1>} : vector<8x24xi32>
    %49 = vector.broadcast %44 : vector<8x1xi32> to vector<8x8xi32>
    %50 = arith.cmpi eq, %47, %49 : vector<8x8xi32>
    %51 = arith.extui %50 : vector<8x8xi1> to vector<8x8xi32>
    %52 = arith.sitofp %51 : vector<8x8xi32> to vector<8x8xf32>
    %53 = vector.broadcast %45 : vector<8x1xi32> to vector<8x24xi32>
    %54 = arith.cmpi eq, %48, %53 : vector<8x24xi32>
    %55 = arith.extui %54 : vector<8x24xi1> to vector<8x24xi32>
    %56 = arith.sitofp %55 : vector<8x24xi32> to vector<8x24xf32>
    %57 = vector.broadcast %46 : vector<8x1xi32> to vector<8x24xi32>
    %58 = arith.cmpi eq, %48, %57 : vector<8x24xi32>
    %59 = arith.extui %58 : vector<8x24xi1> to vector<8x24xi32>
    %60 = arith.sitofp %59 : vector<8x24xi32> to vector<8x24xf32>
    %cst_45 = arith.constant dense<0.000000e+00> : vector<8x32xf32>
    %61 = tpu.matmul %52, %12, %cst_45 {dimension_numbers = #tpu.dot_dimension_numbers<[1], [0], [0], [1], [0, 0, 1, 1], [], []>} : vector<8x8xf32>, vector<8x32xf32>, vector<8x32xf32> -> vector<8x32xf32>
    %cst_46 = arith.constant dense<0.000000e+00> : vector<8x32xf32>
    %62 = tpu.matmul %56, %43, %cst_46 {dimension_numbers = #tpu.dot_dimension_numbers<[1], [0], [0], [1], [0, 0, 1, 1], [], []>} : vector<8x24xf32>, vector<24x32xf32>, vector<8x32xf32> -> vector<8x32xf32>
    %cst_47 = arith.constant dense<0.000000e+00> : vector<8x32xf32>
    %63 = tpu.matmul %60, %43, %cst_47 {dimension_numbers = #tpu.dot_dimension_numbers<[1], [0], [0], [1], [0, 0, 1, 1], [], []>} : vector<8x24xf32>, vector<24x32xf32>, vector<8x32xf32> -> vector<8x32xf32>
    %cst_48 = arith.constant dense<0.000000e+00> : vector<8x32xf32>
    %64 = tpu.matmul %52, %0, %cst_48 {dimension_numbers = #tpu.dot_dimension_numbers<[1], [0], [0], [1], [0, 0, 1, 1], [], []>} : vector<8x8xf32>, vector<8x32xf32>, vector<8x32xf32> -> vector<8x32xf32>
    %cst_49 = arith.constant dense<0.000000e+00> : vector<8x32xf32>
    %65 = tpu.matmul %56, %1, %cst_49 {dimension_numbers = #tpu.dot_dimension_numbers<[1], [0], [0], [1], [0, 0, 1, 1], [], []>} : vector<8x24xf32>, vector<24x32xf32>, vector<8x32xf32> -> vector<8x32xf32>
    %cst_50 = arith.constant dense<0.000000e+00> : vector<8x32xf32>
    %66 = tpu.matmul %60, %1, %cst_50 {dimension_numbers = #tpu.dot_dimension_numbers<[1], [0], [0], [1], [0, 0, 1, 1], [], []>} : vector<8x24xf32>, vector<24x32xf32>, vector<8x32xf32> -> vector<8x32xf32>
    %67 = arith.mulf %61, %62 : vector<8x32xf32>
    %cst_51 = arith.constant dense<0.000000e+00> : vector<8xf32>
    %68 = vector.multi_reduction <add>, %67, %cst_51 [1] : vector<8x32xf32> to vector<8xf32>
    %69 = vector.shape_cast %68 : vector<8xf32> to vector<8x1xf32>
    %cst_52 = arith.constant dense<0.000000e+00> : vector<8x8xf32>
    %70 = tpu.matmul %61, %63, %cst_52 {dimension_numbers = #tpu.dot_dimension_numbers<[1], [1], [0], [0], [0, 0, 1, 0], [], []>} : vector<8x32xf32>, vector<8x32xf32>, vector<8x8xf32> -> vector<8x8xf32>
    %71 = vector.broadcast %69 : vector<8x1xf32> to vector<8x8xf32>
    %72 = arith.subf %70, %71 : vector<8x8xf32>
    %cst_53 = arith.constant 0.000000e+00 : f32
    %73 = vector.broadcast %cst_53 : f32 to vector<8x8xf32>
    %74 = arith.maximumf %72, %73 : vector<8x8xf32>
    %75 = math.absf %72 : vector<8x8xf32>
    %cst_54 = arith.constant 0.000000e+00 : f32
    %76 = vector.broadcast %cst_54 : f32 to vector<8x8xf32>
    %77 = arith.subf %76, %75 : vector<8x8xf32>
    %78 = math.exp %77 : vector<8x8xf32>
    %79 = math.log1p %78 : vector<8x8xf32>
    %80 = arith.addf %74, %79 : vector<8x8xf32>
    %81 = vector.shape_cast %80 : vector<8x8xf32> to vector<1x8x8xf32>
    %cst_55 = arith.constant dense<0.000000e+00> : vector<1xf32>
    %82 = vector.multi_reduction <add>, %81, %cst_55 [1, 2] : vector<1x8x8xf32> to vector<1xf32>
    %83 = vector.shape_cast %82 : vector<1xf32> to vector<1x1x1xf32>
    %84 = vector.extract %83[0, 0, 0] : f32 from vector<1x1x1xf32>
    %cst_56 = arith.constant 6.400000e+01 : f32
    %85 = arith.divf %84, %cst_56 : f32
    %86 = arith.mulf %64, %64 : vector<8x32xf32>
    %87 = vector.shape_cast %86 : vector<8x32xf32> to vector<1x8x32xf32>
    %cst_57 = arith.constant dense<0.000000e+00> : vector<1xf32>
    %88 = vector.multi_reduction <add>, %87, %cst_57 [1, 2] : vector<1x8x32xf32> to vector<1xf32>
    %89 = vector.shape_cast %88 : vector<1xf32> to vector<1x1x1xf32>
    %90 = vector.extract %89[0, 0, 0] : f32 from vector<1x1x1xf32>
    %91 = arith.mulf %65, %65 : vector<8x32xf32>
    %92 = vector.shape_cast %91 : vector<8x32xf32> to vector<1x8x32xf32>
    %cst_58 = arith.constant dense<0.000000e+00> : vector<1xf32>
    %93 = vector.multi_reduction <add>, %92, %cst_58 [1, 2] : vector<1x8x32xf32> to vector<1xf32>
    %94 = vector.shape_cast %93 : vector<1xf32> to vector<1x1x1xf32>
    %95 = vector.extract %94[0, 0, 0] : f32 from vector<1x1x1xf32>
    %96 = arith.addf %90, %95 : f32
    %97 = arith.mulf %66, %66 : vector<8x32xf32>
    %98 = vector.shape_cast %97 : vector<8x32xf32> to vector<1x8x32xf32>
    %cst_59 = arith.constant dense<0.000000e+00> : vector<1xf32>
    %99 = vector.multi_reduction <add>, %98, %cst_59 [1, 2] : vector<1x8x32xf32> to vector<1xf32>
    %100 = vector.shape_cast %99 : vector<1xf32> to vector<1x1x1xf32>
    %101 = vector.extract %100[0, 0, 0] : f32 from vector<1x1x1xf32>
    %102 = arith.addf %96, %101 : f32
    %cst_60 = arith.constant 5.000000e-01 : f32
    %103 = arith.mulf %cst_60, %102 : f32
    %cst_61 = arith.constant 9.99999974E-5 : f32
    %104 = arith.mulf %cst_61, %103 : f32
    %cst_62 = arith.constant 8.000000e+00 : f32
    %105 = arith.divf %104, %cst_62 : f32
    %106 = arith.addf %85, %105 : f32
    %c0_63 = arith.constant 0 : index
    %107 = memref.load %arg15[%c0_63] : memref<3xf32, #tpu.memory_space<smem>>
    memref.store %106, %arg15[%c0_63] : memref<3xf32, #tpu.memory_space<smem>>
    %c1 = arith.constant 1 : index
    %108 = memref.load %arg15[%c1] : memref<3xf32, #tpu.memory_space<smem>>
    memref.store %85, %arg15[%c1] : memref<3xf32, #tpu.memory_space<smem>>
    %c2 = arith.constant 2 : index
    %109 = memref.load %arg15[%c2] : memref<3xf32, #tpu.memory_space<smem>>
    memref.store %105, %arg15[%c2] : memref<3xf32, #tpu.memory_space<smem>>
    return
  }
}

</mosaic_0001>

<llo_original>
// kernel: tpu_custom_call.1
$region0: #{tpu_custom_call.1}
  #allocation0 [shape = 'u32[]', space=smem, size = 0x4, offset = 0x4, fixed_abs, tag = 'smem constant byte address 0x4 - core index']
  #allocation1 [shape = 'u32[72,128]{1,0:T(1,128)}', space=vmem, size = 0x9000, scoped, tag = 'internal scratch']
  #allocation2 [shape = 'f32[32,32]{1,0:T(8,128)}', space=vmem, size = 0x4000, scoped, tag = 'scratch operand']
  %s0 = inlined_call_operand.vmem [shape: f32[32,32], index: 0, kind: input, shape index: {}]
  %s1 = inlined_call_operand.vmem [shape: f32[24,24], index: 1, kind: input, shape index: {}]
  %s2 = inlined_call_operand.vmem [shape: f32[24,24], index: 2, kind: input, shape index: {}]
  %s3 = inlined_call_operand.vmem [shape: f32[8,32], index: 3, kind: input, shape index: {}]
  %s4 = inlined_call_operand.vmem [shape: f32[24,32], index: 4, kind: input, shape index: {}]
  %s5 = inlined_call_operand.vmem [shape: f32[32,384], index: 5, kind: input, shape index: {}]
  %s6 = inlined_call_operand.vmem [shape: f32[1,384], index: 6, kind: input, shape index: {}]
  %s7 = inlined_call_operand.vmem [shape: f32[32,384], index: 7, kind: input, shape index: {}]
  %s8 = inlined_call_operand.vmem [shape: f32[1,384], index: 8, kind: input, shape index: {}]
  %s9 = inlined_call_operand.vmem [shape: f32[384,32], index: 9, kind: input, shape index: {}]
  %s10 = inlined_call_operand.vmem [shape: f32[384,32], index: 10, kind: input, shape index: {}]
  %s11 = inlined_call_operand.vmem [shape: f32[1,32], index: 11, kind: input, shape index: {}]
  %s12 = inlined_call_operand.vmem [shape: s32[8,1], index: 12, kind: input, shape index: {}]
  %s13 = inlined_call_operand.vmem [shape: s32[8,1], index: 13, kind: input, shape index: {}]
  %s14 = inlined_call_operand.vmem [shape: s32[8,1], index: 14, kind: input, shape index: {}]
  %s15 = inlined_call_operand.hbm [shape: f32[3], index: 15, kind: output, shape index: {}]
  %s16 = sld [smem:[#allocation0]]
  $region70: #{tpu_custom_call.1} parent=0
    _
  %s18 = ssub.s32 1, %s16
  %s19 = scalar_select 0, %s18, %s16
  $region1: #{tpu_custom_call.1} parent=0
    #allocation3 [shape = 'u8[512]{0}', space=smem, size = 0x200, scoped, tag = 'output window, operand 0, single buffered']
    #allocation4 [shape = 's32[1]{0}', space=sflag, size = 0x4, scoped, tag = 'scoped memory for tpu_custom_call.1']
    %20 = vsyncpa [#allocation4], 0
    // Predicated region
    $region2: #{tpu_custom_call.1} parent=1 // pred_check
      _
    $region3: #{tpu_custom_call.1} parent=1 // pred_check_branch
      %22 = sbr.rel (0) target = $region5
    $region4: #{tpu_custom_call.1} parent=1 // pred_region
      _
    $region5: #{tpu_custom_call.1} parent=1 // pred_fallthru
      _
    // Predicated region
    $region6: #{tpu_custom_call.1} parent=1 // pred_check
      _
    $region7: #{tpu_custom_call.1} parent=1 // pred_check_branch
      %24 = sbr.rel (0) target = $region9
    $region8: #{tpu_custom_call.1} parent=1 // pred_region
      _
    $region9: #{tpu_custom_call.1} parent=1 // pred_fallthru
      _
    // Predicated region
    $region10: #{tpu_custom_call.1} parent=1 // pred_check
      _
    $region11: #{tpu_custom_call.1} parent=1 // pred_check_branch
      %26 = sbr.rel (0) target = $region13
    $region12: #{tpu_custom_call.1} parent=1 // pred_region
      _
    $region13: #{tpu_custom_call.1} parent=1 // pred_fallthru
      _
    // Predicated region
    $region14: #{tpu_custom_call.1} parent=1 // pred_check
      _
    $region15: #{tpu_custom_call.1} parent=1 // pred_check_branch
      %28 = sbr.rel (0) target = $region17
    $region16: #{tpu_custom_call.1} parent=1 // pred_region
      _
    $region17: #{tpu_custom_call.1} parent=1 // pred_fallthru
      _
    // Predicated region
    $region18: #{tpu_custom_call.1} parent=1 // pred_check
      _
    $region19: #{tpu_custom_call.1} parent=1 // pred_check_branch
      %30 = sbr.rel (0) target = $region21
    $region20: #{tpu_custom_call.1} parent=1 // pred_region
      _
    $region21: #{tpu_custom_call.1} parent=1 // pred_fallthru
      _
    // Predicated region
    $region22: #{tpu_custom_call.1} parent=1 // pred_check
      _
    $region23: #{tpu_custom_call.1} parent=1 // pred_check_branch
      %32 = sbr.rel (0) target = $region25
    $region24: #{tpu_custom_call.1} parent=1 // pred_region
      _
    $region25: #{tpu_custom_call.1} parent=1 // pred_fallthru
      _
    // Predicated region
    $region26: #{tpu_custom_call.1} parent=1 // pred_check
      _
    $region27: #{tpu_custom_call.1} parent=1 // pred_check_branch
      %34 = sbr.rel (0) target = $region29
    $region28: #{tpu_custom_call.1} parent=1 // pred_region
      _
    $region29: #{tpu_custom_call.1} parent=1 // pred_fallthru
      _
    // Predicated region
    $region30: #{tpu_custom_call.1} parent=1 // pred_check
      _
    $region31: #{tpu_custom_call.1} parent=1 // pred_check_branch
      %36 = sbr.rel (0) target = $region33
    $region32: #{tpu_custom_call.1} parent=1 // pred_region
      _
    $region33: #{tpu_custom_call.1} parent=1 // pred_fallthru
      _
    // Predicated region
    $region34: #{tpu_custom_call.1} parent=1 // pred_check
      _
    $region35: #{tpu_custom_call.1} parent=1 // pred_check_branch
      %38 = sbr.rel (0) target = $region37
    $region36: #{tpu_custom_call.1} parent=1 // pred_region
      _
    $region37: #{tpu_custom_call.1} parent=1 // pred_fallthru
      _
    // Predicated region
    $region38: #{tpu_custom_call.1} parent=1 // pred_check
      _
    $region39: #{tpu_custom_call.1} parent=1 // pred_check_branch
      %40 = sbr.rel (0) target = $region41
    $region40: #{tpu_custom_call.1} parent=1 // pred_region
      _
    $region41: #{tpu_custom_call.1} parent=1 // pred_fallthru
      _
    // Predicated region
    $region42: #{tpu_custom_call.1} parent=1 // pred_check
      _
    $region43: #{tpu_custom_call.1} parent=1 // pred_check_branch
      %42 = sbr.rel (0) target = $region45
    $region44: #{tpu_custom_call.1} parent=1 // pred_region
      _
    $region45: #{tpu_custom_call.1} parent=1 // pred_fallthru
      _
    // Predicated region
    $region46: #{tpu_custom_call.1} parent=1 // pred_check
      _
    $region47: #{tpu_custom_call.1} parent=1 // pred_check_branch
      %44 = sbr.rel (0) target = $region49
    $region48: #{tpu_custom_call.1} parent=1 // pred_region
      _
    $region49: #{tpu_custom_call.1} parent=1 // pred_fallthru
      _
    // Predicated region
    $region50: #{tpu_custom_call.1} parent=1 // pred_check
      _
    $region51: #{tpu_custom_call.1} parent=1 // pred_check_branch
      %46 = sbr.rel (0) target = $region53
    $region52: #{tpu_custom_call.1} parent=1 // pred_region
      _
    $region53: #{tpu_custom_call.1} parent=1 // pred_fallthru
      _
    // Predicated region
    $region54: #{tpu_custom_call.1} parent=1 // pred_check
      _
    $region55: #{tpu_custom_call.1} parent=1 // pred_check_branch
      %48 = sbr.rel (0) target = $region57
    $region56: #{tpu_custom_call.1} parent=1 // pred_region
      _
    $region57: #{tpu_custom_call.1} parent=1 // pred_fallthru
      _
    // Predicated region
    $region58: #{tpu_custom_call.1} parent=1 // pred_check
      _
    $region59: #{tpu_custom_call.1} parent=1 // pred_check_branch
      %50 = sbr.rel (0) target = $region61
    $region60: #{tpu_custom_call.1} parent=1 // pred_region
      _
    $region61: #{tpu_custom_call.1} parent=1 // pred_fallthru
      _
    %v51 = vld [vmem:[%s3] sm:$0xff]
    %v52 = vld [vmem:[%s4] sm:$0xff]
    %v53 = vld [vmem:[%s4 + $0x8] sm:$0xff]
    %v54 = vld [vmem:[%s4 + $0x10] sm:$0xff]
    %v55 = vld [vmem:[%s0] sm:$0xff]
    %v56 = vld [vmem:[%s0 + $0x8] sm:$0xff]
    %v57 = vld [vmem:[%s0 + $0x10] sm:$0xff]
    %v58 = vld [vmem:[%s0 + $0x18] sm:$0xff]
    %vm59 = vcmask 261120
    %60 = vst.msk [vmem:[#allocation2] sm:$0xff] %vm59, %v51
    %61 = vst.msk [vmem:[#allocation2 + $0x8] sm:$0xff] %vm59, %v52
    %62 = vst.msk [vmem:[#allocation2 + $0x10] sm:$0xff] %vm59, %v53
    %63 = vst.msk [vmem:[#allocation2 + $0x18] sm:$0xff] %vm59, %v54
    %v64 = vld [vmem:[#allocation2] sm:$0xff]
    %v65 = vld [vmem:[#allocation2 + $0x8] sm:$0xff]
    %v66 = vld [vmem:[#allocation2 + $0x10] sm:$0xff]
    %v67 = vld [vmem:[#allocation2 + $0x18] sm:$0xff]
    %v69 = vsel %vm59, %v55, 0
    %v72 = vsel %vm59, %v56, 0
    %v75 = vsel %vm59, %v57, 0
    %v78 = vsel %vm59, %v58, 0
    %80 = vmatpush.msra.mxu0 0.0
    %81 = vmatpush.msra.mxu0 0.0
    %82 = vmatpush.msra.mxu0 0.0
    %83 = vmatpush.msra.mxu0 0.0
    %84 = vmatpush.msra.mxu0 0.0
    %85 = vmatpush.msra.mxu0 0.0
    %86 = vmatpush.msra.mxu0 0.0
    %87 = vmatpush.msra.mxu0 0.0
    %88 = vmatpush.msra.mxu0 0.0
    %89 = vmatpush.msra.mxu0 0.0
    %90 = vmatpush.msra.mxu0 0.0
    %91 = vmatpush.msra.mxu0 0.0
    %92 = vmatpush.msra.mxu0 %v67
    %93 = vmatpush.msra.mxu0 %v66
    %94 = vmatpush.msra.mxu0 %v65
    %95 = vmatpush.msra.mxu0 %v64
    %96 = vmatmul.f32.gmra.mxu0 %v69
    %v97 = vpop.f32.mrf.mxu0
    %v98 = vadd.f32 0.0, %v97
    %99 = vmatmul.f32.gmra.mxu0 %v72
    %v100 = vpop.f32.mrf.mxu0
    %v101 = vadd.f32 0.0, %v100
    %102 = vmatmul.f32.gmra.mxu0 %v75
    %v103 = vpop.f32.mrf.mxu0
    %v104 = vadd.f32 0.0, %v103
    %105 = vmatmul.f32.gmra.mxu0 %v78
    %v106 = vpop.f32.mrf.mxu0
    %v107 = vadd.f32 0.0, %v106
    %108 = vdwg.mxu0
    %109 = vmatpush.msra.mxu0 0.0
    %110 = vmatpush.msra.mxu0 0.0
    %111 = vmatpush.msra.mxu0 0.0
    %112 = vmatpush.msra.mxu0 0.0
    %113 = vmatpush.msra.mxu0 0.0
    %114 = vmatpush.msra.mxu0 0.0
    %115 = vmatpush.msra.mxu0 0.0
    %116 = vmatpush.msra.mxu0 0.0
    %117 = vmatpush.msra.mxu0 0.0
    %118 = vmatpush.msra.mxu0 0.0
    %119 = vmatpush.msra.mxu0 0.0
    %120 = vmatpush.msra.mxu0 0.0
    %121 = vmatpush.msra.mxu0 %v107
    %122 = vmatpush.msra.mxu0 %v104
    %123 = vmatpush.msra.mxu0 %v101
    %124 = vmatpush.msra.mxu0 %v98
    %125 = vmatmul.f32.gmra.mxu0 %v69
    %v126 = vpop.f32.mrf.mxu0
    %v127 = vadd.f32 0.0, %v126
    %128 = vmatmul.f32.gmra.mxu0 %v72
    %v129 = vpop.f32.mrf.mxu0
    %v130 = vadd.f32 0.0, %v129
    %131 = vmatmul.f32.gmra.mxu0 %v75
    %v132 = vpop.f32.mrf.mxu0
    %v133 = vadd.f32 0.0, %v132
    %134 = vmatmul.f32.gmra.mxu0 %v78
    %v135 = vpop.f32.mrf.mxu0
    %v136 = vadd.f32 0.0, %v135
    %137 = vdwg.mxu0
    %v138 = vadd.f32 %v98, %v127
    %v139 = vadd.f32 %v101, %v130
    %v140 = vadd.f32 %v104, %v133
    %v141 = vadd.f32 %v107, %v136
    %v142 = vadd.f32 %v51, %v138
    %v143 = vmul.f32 %v142, 0.33333334
    %v144 = vadd.f32 %v52, %v139
    %v145 = vadd.f32 %v53, %v140
    %v146 = vadd.f32 %v54, %v141
    %v147 = vmul.f32 %v144, 0.33333334
    %v148 = vmul.f32 %v145, 0.33333334
    %v149 = vmul.f32 %v146, 0.33333334
    %v150 = vld [vmem:[%s1] sm:$0xff]
    %v151 = vld [vmem:[%s1 + $0x8] sm:$0xff]
    %v152 = vld [vmem:[%s1 + $0x10] sm:$0xff]
    %vm153 = vcmask 195584
    %v155 = vsel %vm153, %v150, 0
    %v158 = vsel %vm153, %v151, 0
    %v161 = vsel %vm153, %v152, 0
    %163 = vmatpush.msra.mxu0 0.0
    %164 = vmatpush.msra.mxu0 0.0
    %165 = vmatpush.msra.mxu0 0.0
    %166 = vmatpush.msra.mxu0 0.0
    %167 = vmatpush.msra.mxu0 0.0
    %168 = vmatpush.msra.mxu0 0.0
    %169 = vmatpush.msra.mxu0 0.0
    %170 = vmatpush.msra.mxu0 0.0
    %171 = vmatpush.msra.mxu0 0.0
    %172 = vmatpush.msra.mxu0 0.0
    %173 = vmatpush.msra.mxu0 0.0
    %174 = vmatpush.msra.mxu0 0.0
    %175 = vmatpush.msra.mxu0 0.0
    %176 = vmatpush.msra.mxu0 %v149
    %177 = vmatpush.msra.mxu0 %v148
    %178 = vmatpush.msra.mxu0 %v147
    %179 = vmatmul.f32.gmra.mxu0 %v155
    %v180 = vpop.f32.mrf.mxu0
    %v181 = vadd.f32 0.0, %v180
    %182 = vmatmul.f32.gmra.mxu0 %v158
    %v183 = vpop.f32.mrf.mxu0
    %v184 = vadd.f32 0.0, %v183
    %185 = vmatmul.f32.gmra.mxu0 %v161
    %v186 = vpop.f32.mrf.mxu0
    %v187 = vadd.f32 0.0, %v186
    %188 = vdwg.mxu0
    %v189 = vld [vmem:[%s2] sm:$0xff]
    %v190 = vld [vmem:[%s2 + $0x8] sm:$0xff]
    %v191 = vld [vmem:[%s2 + $0x10] sm:$0xff]
    %v193 = vsel %vm153, %v189, 0
    %v196 = vsel %vm153, %v190, 0
    %v199 = vsel %vm153, %v191, 0
    %201 = vmatpush.msra.mxu0 0.0
    %202 = vmatpush.msra.mxu0 0.0
    %203 = vmatpush.msra.mxu0 0.0
    %204 = vmatpush.msra.mxu0 0.0
    %205 = vmatpush.msra.mxu0 0.0
    %206 = vmatpush.msra.mxu0 0.0
    %207 = vmatpush.msra.mxu0 0.0
    %208 = vmatpush.msra.mxu0 0.0
    %209 = vmatpush.msra.mxu0 0.0
    %210 = vmatpush.msra.mxu0 0.0
    %211 = vmatpush.msra.mxu0 0.0
    %212 = vmatpush.msra.mxu0 0.0
    %213 = vmatpush.msra.mxu0 0.0
    %214 = vmatpush.msra.mxu0 %v149
    %215 = vmatpush.msra.mxu0 %v148
    %216 = vmatpush.msra.mxu0 %v147
    %217 = vmatmul.f32.gmra.mxu0 %v193
    %v218 = vpop.f32.mrf.mxu0
    %v219 = vadd.f32 0.0, %v218
    %220 = vmatmul.f32.gmra.mxu0 %v196
    %v221 = vpop.f32.mrf.mxu0
    %v222 = vadd.f32 0.0, %v221
    %223 = vmatmul.f32.gmra.mxu0 %v199
    %v224 = vpop.f32.mrf.mxu0
    %v225 = vadd.f32 0.0, %v224
    %226 = vdwg.mxu0
    %v227 = vld [vmem:[%s5] sm:$0xff]
    %v228 = vld [vmem:[%s5 + $0x8] sm:$0xff]
    %v229 = vld [vmem:[%s5 + $0x10] sm:$0xff]
    %v230 = vld [vmem:[%s5 + $0x18] sm:$0xff]
    %v231 = vld [vmem:[%s5 + $0x20] sm:$0xff]
    %v232 = vld [vmem:[%s5 + $0x28] sm:$0xff]
    %v233 = vld [vmem:[%s5 + $0x30] sm:$0xff]
    %v234 = vld [vmem:[%s5 + $0x38] sm:$0xff]
    %v235 = vld [vmem:[%s5 + $0x40] sm:$0xff]
    %v236 = vld [vmem:[%s5 + $0x48] sm:$0xff]
    %v237 = vld [vmem:[%s5 + $0x50] sm:$0xff]
    %v238 = vld [vmem:[%s5 + $0x58] sm:$0xff]
    %v239 = vld [vmem:[%s6] sm:$0x7]
    %v241 = vperm.slane %v239, 0
    %v242 = vperm.slane %v239, 1
    %v243 = vperm.slane %v239, 2
    %v248 = vsel %vm59, %v181, 0
    %v251 = vsel %vm59, %v184, 0
    %v254 = vsel %vm59, %v187, 0
    %256 = vmatpush.msra.mxu0 0.0
    %257 = vmatpush.msra.mxu0 0.0
    %258 = vmatpush.msra.mxu0 0.0
    %259 = vmatpush.msra.mxu0 0.0
    %260 = vmatpush.msra.mxu0 0.0
    %261 = vmatpush.msra.mxu0 0.0
    %262 = vmatpush.msra.mxu0 0.0
    %263 = vmatpush.msra.mxu0 0.0
    %264 = vmatpush.msra.mxu0 0.0
    %265 = vmatpush.msra.mxu0 0.0
    %266 = vmatpush.msra.mxu0 0.0
    %267 = vmatpush.msra.mxu0 0.0
    %268 = vmatpush.msra.mxu0 %v236
    %269 = vmatpush.msra.mxu0 %v233
    %270 = vmatpush.msra.mxu0 %v230
    %271 = vmatpush.msra.mxu0 %v227
    %272 = vmatmul.f32.gmra.mxu0 %v248
    %v273 = vpop.f32.mrf.mxu0
    %v274 = vadd.f32 %v241, %v273
    %275 = vmatmul.f32.gmra.mxu0 %v251
    %v276 = vpop.f32.mrf.mxu0
    %v277 = vadd.f32 %v241, %v276
    %278 = vmatmul.f32.gmra.mxu0 %v254
    %v279 = vpop.f32.mrf.mxu0
    %v280 = vadd.f32 %v241, %v279
    %281 = vdwg.mxu0
    %282 = vmatpush.msra.mxu0 0.0
    %283 = vmatpush.msra.mxu0 0.0
    %284 = vmatpush.msra.mxu0 0.0
    %285 = vmatpush.msra.mxu0 0.0
    %286 = vmatpush.msra.mxu0 0.0
    %287 = vmatpush.msra.mxu0 0.0
    %288 = vmatpush.msra.mxu0 0.0
    %289 = vmatpush.msra.mxu0 0.0
    %290 = vmatpush.msra.mxu0 0.0
    %291 = vmatpush.msra.mxu0 0.0
    %292 = vmatpush.msra.mxu0 0.0
    %293 = vmatpush.msra.mxu0 0.0
    %294 = vmatpush.msra.mxu0 %v237
    %295 = vmatpush.msra.mxu0 %v234
    %296 = vmatpush.msra.mxu0 %v231
    %297 = vmatpush.msra.mxu0 %v228
    %298 = vmatmul.f32.gmra.mxu0 %v248
    %v299 = vpop.f32.mrf.mxu0
    %v300 = vadd.f32 %v242, %v299
    %301 = vmatmul.f32.gmra.mxu0 %v251
    %v302 = vpop.f32.mrf.mxu0
    %v303 = vadd.f32 %v242, %v302
    %304 = vmatmul.f32.gmra.mxu0 %v254
    %v305 = vpop.f32.mrf.mxu0
    %v306 = vadd.f32 %v242, %v305
    %307 = vdwg.mxu0
    %308 = vmatpush.msra.mxu0 0.0
    %309 = vmatpush.msra.mxu0 0.0
    %310 = vmatpush.msra.mxu0 0.0
    %311 = vmatpush.msra.mxu0 0.0
    %312 = vmatpush.msra.mxu0 0.0
    %313 = vmatpush.msra.mxu0 0.0
    %314 = vmatpush.msra.mxu0 0.0
    %315 = vmatpush.msra.mxu0 0.0
    %316 = vmatpush.msra.mxu0 0.0
    %317 = vmatpush.msra.mxu0 0.0
    %318 = vmatpush.msra.mxu0 0.0
    %319 = vmatpush.msra.mxu0 0.0
    %320 = vmatpush.msra.mxu0 %v238
    %321 = vmatpush.msra.mxu0 %v235
    %322 = vmatpush.msra.mxu0 %v232
    %323 = vmatpush.msra.mxu0 %v229
    %324 = vmatmul.f32.gmra.mxu0 %v248
    %v325 = vpop.f32.mrf.mxu0
    %v326 = vadd.f32 %v243, %v325
    %327 = vmatmul.f32.gmra.mxu0 %v251
    %v328 = vpop.f32.mrf.mxu0
    %v329 = vadd.f32 %v243, %v328
    %330 = vmatmul.f32.gmra.mxu0 %v254
    %v331 = vpop.f32.mrf.mxu0
    %v332 = vadd.f32 %v243, %v331
    %333 = vdwg.mxu0
    %v334 = vld [vmem:[%s7] sm:$0xff]
    %v335 = vld [vmem:[%s7 + $0x8] sm:$0xff]
    %v336 = vld [vmem:[%s7 + $0x10] sm:$0xff]
    %v337 = vld [vmem:[%s7 + $0x18] sm:$0xff]
    %v338 = vld [vmem:[%s7 + $0x20] sm:$0xff]
    %v339 = vld [vmem:[%s7 + $0x28] sm:$0xff]
    %v340 = vld [vmem:[%s7 + $0x30] sm:$0xff]
    %v341 = vld [vmem:[%s7 + $0x38] sm:$0xff]
    %v342 = vld [vmem:[%s7 + $0x40] sm:$0xff]
    %v343 = vld [vmem:[%s7 + $0x48] sm:$0xff]
    %v344 = vld [vmem:[%s7 + $0x50] sm:$0xff]
    %v345 = vld [vmem:[%s7 + $0x58] sm:$0xff]
    %v346 = vld [vmem:[%s8] sm:$0x7]
    %v348 = vperm.slane %v346, 0
    %v349 = vperm.slane %v346, 1
    %v350 = vperm.slane %v346, 2
    %v355 = vsel %vm59, %v219, 0
    %v358 = vsel %vm59, %v222, 0
    %v361 = vsel %vm59, %v225, 0
    %363 = vmatpush.msra.mxu0 0.0
    %364 = vmatpush.msra.mxu0 0.0
    %365 = vmatpush.msra.mxu0 0.0
    %366 = vmatpush.msra.mxu0 0.0
    %367 = vmatpush.msra.mxu0 0.0
    %368 = vmatpush.msra.mxu0 0.0
    %369 = vmatpush.msra.mxu0 0.0
    %370 = vmatpush.msra.mxu0 0.0
    %371 = vmatpush.msra.mxu0 0.0
    %372 = vmatpush.msra.mxu0 0.0
    %373 = vmatpush.msra.mxu0 0.0
    %374 = vmatpush.msra.mxu0 0.0
    %375 = vmatpush.msra.mxu0 %v343
    %376 = vmatpush.msra.mxu0 %v340
    %377 = vmatpush.msra.mxu0 %v337
    %378 = vmatpush.msra.mxu0 %v334
    %379 = vmatmul.f32.gmra.mxu0 %v355
    %v380 = vpop.f32.mrf.mxu0
    %v381 = vadd.f32 %v348, %v380
    %382 = vmatmul.f32.gmra.mxu0 %v358
    %v383 = vpop.f32.mrf.mxu0
    %v384 = vadd.f32 %v348, %v383
    %385 = vmatmul.f32.gmra.mxu0 %v361
    %v386 = vpop.f32.mrf.mxu0
    %v387 = vadd.f32 %v348, %v386
    %388 = vdwg.mxu0
    %389 = vmatpush.msra.mxu0 0.0
    %390 = vmatpush.msra.mxu0 0.0
    %391 = vmatpush.msra.mxu0 0.0
    %392 = vmatpush.msra.mxu0 0.0
    %393 = vmatpush.msra.mxu0 0.0
    %394 = vmatpush.msra.mxu0 0.0
    %395 = vmatpush.msra.mxu0 0.0
    %396 = vmatpush.msra.mxu0 0.0
    %397 = vmatpush.msra.mxu0 0.0
    %398 = vmatpush.msra.mxu0 0.0
    %399 = vmatpush.msra.mxu0 0.0
    %400 = vmatpush.msra.mxu0 0.0
    %401 = vmatpush.msra.mxu0 %v344
    %402 = vmatpush.msra.mxu0 %v341
    %403 = vmatpush.msra.mxu0 %v338
    %404 = vmatpush.msra.mxu0 %v335
    %405 = vmatmul.f32.gmra.mxu0 %v355
    %v406 = vpop.f32.mrf.mxu0
    %v407 = vadd.f32 %v349, %v406
    %408 = vmatmul.f32.gmra.mxu0 %v358
    %v409 = vpop.f32.mrf.mxu0
    %v410 = vadd.f32 %v349, %v409
    %411 = vmatmul.f32.gmra.mxu0 %v361
    %v412 = vpop.f32.mrf.mxu0
    %v413 = vadd.f32 %v349, %v412
    %414 = vdwg.mxu0
    %415 = vmatpush.msra.mxu0 0.0
    %416 = vmatpush.msra.mxu0 0.0
    %417 = vmatpush.msra.mxu0 0.0
    %418 = vmatpush.msra.mxu0 0.0
    %419 = vmatpush.msra.mxu0 0.0
    %420 = vmatpush.msra.mxu0 0.0
    %421 = vmatpush.msra.mxu0 0.0
    %422 = vmatpush.msra.mxu0 0.0
    %423 = vmatpush.msra.mxu0 0.0
    %424 = vmatpush.msra.mxu0 0.0
    %425 = vmatpush.msra.mxu0 0.0
    %426 = vmatpush.msra.mxu0 0.0
    %427 = vmatpush.msra.mxu0 %v345
    %428 = vmatpush.msra.mxu0 %v342
    %429 = vmatpush.msra.mxu0 %v339
    %430 = vmatpush.msra.mxu0 %v336
    %431 = vmatmul.f32.gmra.mxu0 %v355
    %v432 = vpop.f32.mrf.mxu0
    %v433 = vadd.f32 %v350, %v432
    %434 = vmatmul.f32.gmra.mxu0 %v358
    %v435 = vpop.f32.mrf.mxu0
    %v436 = vadd.f32 %v350, %v435
    %437 = vmatmul.f32.gmra.mxu0 %v361
    %v438 = vpop.f32.mrf.mxu0
    %v439 = vadd.f32 %v350, %v438
    %440 = vdwg.mxu0
    %v441 = vld [vmem:[%s9] sm:$0xff]
    %v442 = vld [vmem:[%s9 + $0x8] sm:$0xff]
    %v443 = vld [vmem:[%s9 + $0x10] sm:$0xff]
    %v444 = vld [vmem:[%s9 + $0x18] sm:$0xff]
    %v445 = vld [vmem:[%s9 + $0x20] sm:$0xff]
    %v446 = vld [vmem:[%s9 + $0x28] sm:$0xff]
    %v447 = vld [vmem:[%s9 + $0x30] sm:$0xff]
    %v448 = vld [vmem:[%s9 + $0x38] sm:$0xff]
    %v449 = vld [vmem:[%s9 + $0x40] sm:$0xff]
    %v450 = vld [vmem:[%s9 + $0x48] sm:$0xff]
    %v451 = vld [vmem:[%s9 + $0x50] sm:$0xff]
    %v452 = vld [vmem:[%s9 + $0x58] sm:$0xff]
    %v453 = vld [vmem:[%s9 + $0x60] sm:$0xff]
    %v454 = vld [vmem:[%s9 + $0x68] sm:$0xff]
    %v455 = vld [vmem:[%s9 + $0x70] sm:$0xff]
    %v456 = vld [vmem:[%s9 + $0x78] sm:$0xff]
    %v457 = vld [vmem:[%s9 + $0x80] sm:$0xff]
    %v458 = vld [vmem:[%s9 + $0x88] sm:$0xff]
    %v459 = vld [vmem:[%s9 + $0x90] sm:$0xff]
    %v460 = vld [vmem:[%s9 + $0x98] sm:$0xff]
    %v461 = vld [vmem:[%s9 + $0xa0] sm:$0xff]
    %v462 = vld [vmem:[%s9 + $0xa8] sm:$0xff]
    %v463 = vld [vmem:[%s9 + $0xb0] sm:$0xff]
    %v464 = vld [vmem:[%s9 + $0xb8] sm:$0xff]
    %v465 = vld [vmem:[%s9 + $0xc0] sm:$0xff]
    %v466 = vld [vmem:[%s9 + $0xc8] sm:$0xff]
    %v467 = vld [vmem:[%s9 + $0xd0] sm:$0xff]
    %v468 = vld [vmem:[%s9 + $0xd8] sm:$0xff]
    %v469 = vld [vmem:[%s9 + $0xe0] sm:$0xff]
    %v470 = vld [vmem:[%s9 + $0xe8] sm:$0xff]
    %v471 = vld [vmem:[%s9 + $0xf0] sm:$0xff]
    %v472 = vld [vmem:[%s9 + $0xf8] sm:$0xff]
    %v473 = vld [vmem:[%s9 + $0x100] sm:$0xff]
    %v474 = vld [vmem:[%s9 + $0x108] sm:$0xff]
    %v475 = vld [vmem:[%s9 + $0x110] sm:$0xff]
    %v476 = vld [vmem:[%s9 + $0x118] sm:$0xff]
    %v477 = vld [vmem:[%s9 + $0x120] sm:$0xff]
    %v478 = vld [vmem:[%s9 + $0x128] sm:$0xff]
    %v479 = vld [vmem:[%s9 + $0x130] sm:$0xff]
    %v480 = vld [vmem:[%s9 + $0x138] sm:$0xff]
    %v481 = vld [vmem:[%s9 + $0x140] sm:$0xff]
    %v482 = vld [vmem:[%s9 + $0x148] sm:$0xff]
    %v483 = vld [vmem:[%s9 + $0x150] sm:$0xff]
    %v484 = vld [vmem:[%s9 + $0x158] sm:$0xff]
    %v485 = vld [vmem:[%s9 + $0x160] sm:$0xff]
    %v486 = vld [vmem:[%s9 + $0x168] sm:$0xff]
    %v487 = vld [vmem:[%s9 + $0x170] sm:$0xff]
    %v488 = vld [vmem:[%s9 + $0x178] sm:$0xff]
    %v489 = vld [vmem:[%s10] sm:$0xff]
    %v490 = vld [vmem:[%s10 + $0x8] sm:$0xff]
    %v491 = vld [vmem:[%s10 + $0x10] sm:$0xff]
    %v492 = vld [vmem:[%s10 + $0x18] sm:$0xff]
    %v493 = vld [vmem:[%s10 + $0x20] sm:$0xff]
    %v494 = vld [vmem:[%s10 + $0x28] sm:$0xff]
    %v495 = vld [vmem:[%s10 + $0x30] sm:$0xff]
    %v496 = vld [vmem:[%s10 + $0x38] sm:$0xff]
    %v497 = vld [vmem:[%s10 + $0x40] sm:$0xff]
    %v498 = vld [vmem:[%s10 + $0x48] sm:$0xff]
    %v499 = vld [vmem:[%s10 + $0x50] sm:$0xff]
    %v500 = vld [vmem:[%s10 + $0x58] sm:$0xff]
    %v501 = vld [vmem:[%s10 + $0x60] sm:$0xff]
    %v502 = vld [vmem:[%s10 + $0x68] sm:$0xff]
    %v503 = vld [vmem:[%s10 + $0x70] sm:$0xff]
    %v504 = vld [vmem:[%s10 + $0x78] sm:$0xff]
    %v505 = vld [vmem:[%s10 + $0x80] sm:$0xff]
    %v506 = vld [vmem:[%s10 + $0x88] sm:$0xff]
    %v507 = vld [vmem:[%s10 + $0x90] sm:$0xff]
    %v508 = vld [vmem:[%s10 + $0x98] sm:$0xff]
    %v509 = vld [vmem:[%s10 + $0xa0] sm:$0xff]
    %v510 = vld [vmem:[%s10 + $0xa8] sm:$0xff]
    %v511 = vld [vmem:[%s10 + $0xb0] sm:$0xff]
    %v512 = vld [vmem:[%s10 + $0xb8] sm:$0xff]
    %v513 = vld [vmem:[%s10 + $0xc0] sm:$0xff]
    %v514 = vld [vmem:[%s10 + $0xc8] sm:$0xff]
    %v515 = vld [vmem:[%s10 + $0xd0] sm:$0xff]
    %v516 = vld [vmem:[%s10 + $0xd8] sm:$0xff]
    %v517 = vld [vmem:[%s10 + $0xe0] sm:$0xff]
    %v518 = vld [vmem:[%s10 + $0xe8] sm:$0xff]
    %v519 = vld [vmem:[%s10 + $0xf0] sm:$0xff]
    %v520 = vld [vmem:[%s10 + $0xf8] sm:$0xff]
    %v521 = vld [vmem:[%s10 + $0x100] sm:$0xff]
    %v522 = vld [vmem:[%s10 + $0x108] sm:$0xff]
    %v523 = vld [vmem:[%s10 + $0x110] sm:$0xff]
    %v524 = vld [vmem:[%s10 + $0x118] sm:$0xff]
    %v525 = vld [vmem:[%s10 + $0x120] sm:$0xff]
    %v526 = vld [vmem:[%s10 + $0x128] sm:$0xff]
    %v527 = vld [vmem:[%s10 + $0x130] sm:$0xff]
    %v528 = vld [vmem:[%s10 + $0x138] sm:$0xff]
    %v529 = vld [vmem:[%s10 + $0x140] sm:$0xff]
    %v530 = vld [vmem:[%s10 + $0x148] sm:$0xff]
    %v531 = vld [vmem:[%s10 + $0x150] sm:$0xff]
    %v532 = vld [vmem:[%s10 + $0x158] sm:$0xff]
    %v533 = vld [vmem:[%s10 + $0x160] sm:$0xff]
    %v534 = vld [vmem:[%s10 + $0x168] sm:$0xff]
    %v535 = vld [vmem:[%s10 + $0x170] sm:$0xff]
    %v536 = vld [vmem:[%s10 + $0x178] sm:$0xff]
    %537 = vmatpush.msra.mxu0 %v504
    %538 = vmatpush.msra.mxu0 %v503
    %539 = vmatpush.msra.mxu0 %v502
    %540 = vmatpush.msra.mxu0 %v501
    %541 = vmatpush.msra.mxu0 %v500
    %542 = vmatpush.msra.mxu0 %v499
    %543 = vmatpush.msra.mxu0 %v498
    %544 = vmatpush.msra.mxu0 %v497
    %545 = vmatpush.msra.mxu0 %v496
    %546 = vmatpush.msra.mxu0 %v495
    %547 = vmatpush.msra.mxu0 %v494
    %548 = vmatpush.msra.mxu0 %v493
    %549 = vmatpush.msra.mxu0 %v492
    %550 = vmatpush.msra.mxu0 %v491
    %551 = vmatpush.msra.mxu0 %v490
    %552 = vmatpush.msra.mxu0 %v489
    %553 = vmatmul.f32.gmra.mxu0 %v381
    %v554 = vpop.f32.mrf.mxu0
    %v555 = vadd.f32 0.0, %v554
    %556 = vmatmul.f32.gmra.mxu0 %v384
    %v557 = vpop.f32.mrf.mxu0
    %v558 = vadd.f32 0.0, %v557
    %559 = vmatmul.f32.gmra.mxu0 %v387
    %v560 = vpop.f32.mrf.mxu0
    %v561 = vadd.f32 0.0, %v560
    %562 = vdwg.mxu0
    %563 = vmatpush.msra.mxu0 %v520
    %564 = vmatpush.msra.mxu0 %v519
    %565 = vmatpush.msra.mxu0 %v518
    %566 = vmatpush.msra.mxu0 %v517
    %567 = vmatpush.msra.mxu0 %v516
    %568 = vmatpush.msra.mxu0 %v515
    %569 = vmatpush.msra.mxu0 %v514
    %570 = vmatpush.msra.mxu0 %v513
    %571 = vmatpush.msra.mxu0 %v512
    %572 = vmatpush.msra.mxu0 %v511
    %573 = vmatpush.msra.mxu0 %v510
    %574 = vmatpush.msra.mxu0 %v509
    %575 = vmatpush.msra.mxu0 %v508
    %576 = vmatpush.msra.mxu0 %v507
    %577 = vmatpush.msra.mxu0 %v506
    %578 = vmatpush.msra.mxu0 %v505
    %579 = vmatmul.f32.gmra.mxu0 %v407
    %v580 = vpop.f32.mrf.mxu0
    %v581 = vadd.f32 %v555, %v580
    %582 = vmatmul.f32.gmra.mxu0 %v410
    %v583 = vpop.f32.mrf.mxu0
    %v584 = vadd.f32 %v558, %v583
    %585 = vmatmul.f32.gmra.mxu0 %v413
    %v586 = vpop.f32.mrf.mxu0
    %v587 = vadd.f32 %v561, %v586
    %588 = vdwg.mxu0
    %589 = vmatpush.msra.mxu0 %v536
    %590 = vmatpush.msra.mxu0 %v535
    %591 = vmatpush.msra.mxu0 %v534
    %592 = vmatpush.msra.mxu0 %v533
    %593 = vmatpush.msra.mxu0 %v532
    %594 = vmatpush.msra.mxu0 %v531
    %595 = vmatpush.msra.mxu0 %v530
    %596 = vmatpush.msra.mxu0 %v529
    %597 = vmatpush.msra.mxu0 %v528
    %598 = vmatpush.msra.mxu0 %v527
    %599 = vmatpush.msra.mxu0 %v526
    %600 = vmatpush.msra.mxu0 %v525
    %601 = vmatpush.msra.mxu0 %v524
    %602 = vmatpush.msra.mxu0 %v523
    %603 = vmatpush.msra.mxu0 %v522
    %604 = vmatpush.msra.mxu0 %v521
    %605 = vmatmul.f32.gmra.mxu0 %v433
    %v606 = vpop.f32.mrf.mxu0
    %v607 = vadd.f32 %v581, %v606
    %608 = vmatmul.f32.gmra.mxu0 %v436
    %v609 = vpop.f32.mrf.mxu0
    %v610 = vadd.f32 %v584, %v609
    %611 = vmatmul.f32.gmra.mxu0 %v439
    %v612 = vpop.f32.mrf.mxu0
    %v613 = vadd.f32 %v587, %v612
    %614 = vdwg.mxu0
    %615 = vmatpush.msra.mxu0 %v456
    %616 = vmatpush.msra.mxu0 %v455
    %617 = vmatpush.msra.mxu0 %v454
    %618 = vmatpush.msra.mxu0 %v453
    %619 = vmatpush.msra.mxu0 %v452
    %620 = vmatpush.msra.mxu0 %v451
    %621 = vmatpush.msra.mxu0 %v450
    %622 = vmatpush.msra.mxu0 %v449
    %623 = vmatpush.msra.mxu0 %v448
    %624 = vmatpush.msra.mxu0 %v447
    %625 = vmatpush.msra.mxu0 %v446
    %626 = vmatpush.msra.mxu0 %v445
    %627 = vmatpush.msra.mxu0 %v444
    %628 = vmatpush.msra.mxu0 %v443
    %629 = vmatpush.msra.mxu0 %v442
    %630 = vmatpush.msra.mxu0 %v441
    %631 = vmatmul.f32.gmra.mxu0 %v274
    %v632 = vpop.f32.mrf.mxu0
    %v633 = vadd.f32 %v607, %v632
    %634 = vmatmul.f32.gmra.mxu0 %v277
    %v635 = vpop.f32.mrf.mxu0
    %v636 = vadd.f32 %v610, %v635
    %637 = vmatmul.f32.gmra.mxu0 %v280
    %v638 = vpop.f32.mrf.mxu0
    %v639 = vadd.f32 %v613, %v638
    %640 = vdwg.mxu0
    %641 = vmatpush.msra.mxu0 %v472
    %642 = vmatpush.msra.mxu0 %v471
    %643 = vmatpush.msra.mxu0 %v470
    %644 = vmatpush.msra.mxu0 %v469
    %645 = vmatpush.msra.mxu0 %v468
    %646 = vmatpush.msra.mxu0 %v467
    %647 = vmatpush.msra.mxu0 %v466
    %648 = vmatpush.msra.mxu0 %v465
    %649 = vmatpush.msra.mxu0 %v464
    %650 = vmatpush.msra.mxu0 %v463
    %651 = vmatpush.msra.mxu0 %v462
    %652 = vmatpush.msra.mxu0 %v461
    %653 = vmatpush.msra.mxu0 %v460
    %654 = vmatpush.msra.mxu0 %v459
    %655 = vmatpush.msra.mxu0 %v458
    %656 = vmatpush.msra.mxu0 %v457
    %657 = vmatmul.f32.gmra.mxu0 %v300
    %v658 = vpop.f32.mrf.mxu0
    %v659 = vadd.f32 %v633, %v658
    %660 = vmatmul.f32.gmra.mxu0 %v303
    %v661 = vpop.f32.mrf.mxu0
    %v662 = vadd.f32 %v636, %v661
    %663 = vmatmul.f32.gmra.mxu0 %v306
    %v664 = vpop.f32.mrf.mxu0
    %v665 = vadd.f32 %v639, %v664
    %666 = vdwg.mxu0
    %667 = vmatpush.msra.mxu0 %v488
    %668 = vmatpush.msra.mxu0 %v487
    %669 = vmatpush.msra.mxu0 %v486
    %670 = vmatpush.msra.mxu0 %v485
    %671 = vmatpush.msra.mxu0 %v484
    %672 = vmatpush.msra.mxu0 %v483
    %673 = vmatpush.msra.mxu0 %v482
    %674 = vmatpush.msra.mxu0 %v481
    %675 = vmatpush.msra.mxu0 %v480
    %676 = vmatpush.msra.mxu0 %v479
    %677 = vmatpush.msra.mxu0 %v478
    %678 = vmatpush.msra.mxu0 %v477
    %679 = vmatpush.msra.mxu0 %v476
    %680 = vmatpush.msra.mxu0 %v475
    %681 = vmatpush.msra.mxu0 %v474
    %682 = vmatpush.msra.mxu0 %v473
    %683 = vmatmul.f32.gmra.mxu0 %v326
    %v684 = vpop.f32.mrf.mxu0
    %v685 = vadd.f32 %v659, %v684
    %686 = vmatmul.f32.gmra.mxu0 %v329
    %v687 = vpop.f32.mrf.mxu0
    %v688 = vadd.f32 %v662, %v687
    %689 = vmatmul.f32.gmra.mxu0 %v332
    %v690 = vpop.f32.mrf.mxu0
    %v691 = vadd.f32 %v665, %v690
    %692 = vdwg.mxu0
    %v693 = vld [vmem:[%s11] sm:$0x1]
    %v695 = vperm.slane %v693, 0
    %v697 = vadd.f32 %v685, %v695
    %v698 = vadd.f32 %v688, %v695
    %v699 = vadd.f32 %v691, %v695
    %v700 = vmul.f32 %v697, 0.8
    %v701 = vmul.f32 %v698, 0.8
    %v702 = vmul.f32 %v699, 0.8
    %v703 = vmul.f32 %v147, 0.2
    %v704 = vmul.f32 %v148, 0.2
    %v705 = vmul.f32 %v149, 0.2
    %v706 = vadd.f32 %v700, %v703
    %v707 = vadd.f32 %v701, %v704
    %v708 = vadd.f32 %v702, %v705
    %v709 = vld [vmem:[%s12] sm:$0xff]
    %v710 = vld [vmem:[%s13] sm:$0xff]
    %v711 = vld [vmem:[%s14] sm:$0xff]
    %v712 = vlaneseq
    %v713 = vand.u32 %v712, 127
    %714 = vset.pattern.permute.xlu0 0
    %715 = vperm.xlu0 %714, %v709
    %v716 = vpop.permute.xlu0 %715
    %vm717 = vcmp.eq.s32.totalorder %v713, %v716
    %v718 = vsel %vm717, 1, 0
    %v719 = vcvt.s32.f32 %v718
    %720 = vset.pattern.permute.xlu0 0
    %721 = vperm.xlu0 %720, %v710
    %v722 = vpop.permute.xlu0 %721
    %vm723 = vcmp.eq.s32.totalorder %v713, %v722
    %v724 = vsel %vm723, 1, 0
    %v725 = vcvt.s32.f32 %v724
    %726 = vset.pattern.permute.xlu0 0
    %727 = vperm.xlu0 %726, %v711
    %v728 = vpop.permute.xlu0 %727
    %vm729 = vcmp.eq.s32.totalorder %v713, %v728
    %v730 = vsel %vm729, 1, 0
    %v731 = vcvt.s32.f32 %v730
    %vm732 = vcmask 64512
    %v734 = vsel %vm732, %v719, 0
    %736 = vmatpush.msra.mxu0 0.0
    %737 = vmatpush.msra.mxu0 0.0
    %738 = vmatpush.msra.mxu0 0.0
    %739 = vmatpush.msra.mxu0 0.0
    %740 = vmatpush.msra.mxu0 0.0
    %741 = vmatpush.msra.mxu0 0.0
    %742 = vmatpush.msra.mxu0 0.0
    %743 = vmatpush.msra.mxu0 0.0
    %744 = vmatpush.msra.mxu0 0.0
    %745 = vmatpush.msra.mxu0 0.0
    %746 = vmatpush.msra.mxu0 0.0
    %747 = vmatpush.msra.mxu0 0.0
    %748 = vmatpush.msra.mxu0 0.0
    %749 = vmatpush.msra.mxu0 0.0
    %750 = vmatpush.msra.mxu0 0.0
    %751 = vmatpush.msra.mxu0 %v143
    %752 = vmatmul.f32.gmra.mxu0 %v734
    %v753 = vpop.f32.mrf.mxu0
    %v754 = vadd.f32 0.0, %v753
    %755 = vdwg.mxu0
    %v757 = vsel %vm153, %v725, 0
    %759 = vmatpush.msra.mxu0 0.0
    %760 = vmatpush.msra.mxu0 0.0
    %761 = vmatpush.msra.mxu0 0.0
    %762 = vmatpush.msra.mxu0 0.0
    %763 = vmatpush.msra.mxu0 0.0
    %764 = vmatpush.msra.mxu0 0.0
    %765 = vmatpush.msra.mxu0 0.0
    %766 = vmatpush.msra.mxu0 0.0
    %767 = vmatpush.msra.mxu0 0.0
    %768 = vmatpush.msra.mxu0 0.0
    %769 = vmatpush.msra.mxu0 0.0
    %770 = vmatpush.msra.mxu0 0.0
    %771 = vmatpush.msra.mxu0 0.0
    %772 = vmatpush.msra.mxu0 %v708
    %773 = vmatpush.msra.mxu0 %v707
    %774 = vmatpush.msra.mxu0 %v706
    %775 = vmatmul.f32.gmra.mxu0 %v757
    %v776 = vpop.f32.mrf.mxu0
    %v777 = vadd.f32 0.0, %v776
    %778 = vdwg.mxu0
    %v780 = vsel %vm153, %v731, 0
    %782 = vmatpush.msra.mxu0 0.0
    %783 = vmatpush.msra.mxu0 0.0
    %784 = vmatpush.msra.mxu0 0.0
    %785 = vmatpush.msra.mxu0 0.0
    %786 = vmatpush.msra.mxu0 0.0
    %787 = vmatpush.msra.mxu0 0.0
    %788 = vmatpush.msra.mxu0 0.0
    %789 = vmatpush.msra.mxu0 0.0
    %790 = vmatpush.msra.mxu0 0.0
    %791 = vmatpush.msra.mxu0 0.0
    %792 = vmatpush.msra.mxu0 0.0
    %793 = vmatpush.msra.mxu0 0.0
    %794 = vmatpush.msra.mxu0 0.0
    %795 = vmatpush.msra.mxu0 %v708
    %796 = vmatpush.msra.mxu0 %v707
    %797 = vmatpush.msra.mxu0 %v706
    %798 = vmatmul.f32.gmra.mxu0 %v780
    %v799 = vpop.f32.mrf.mxu0
    %v800 = vadd.f32 0.0, %v799
    %801 = vdwg.mxu0
    %802 = vmatpush.msra.mxu0 0.0
    %803 = vmatpush.msra.mxu0 0.0
    %804 = vmatpush.msra.mxu0 0.0
    %805 = vmatpush.msra.mxu0 0.0
    %806 = vmatpush.msra.mxu0 0.0
    %807 = vmatpush.msra.mxu0 0.0
    %808 = vmatpush.msra.mxu0 0.0
    %809 = vmatpush.msra.mxu0 0.0
    %810 = vmatpush.msra.mxu0 0.0
    %811 = vmatpush.msra.mxu0 0.0
    %812 = vmatpush.msra.mxu0 0.0
    %813 = vmatpush.msra.mxu0 0.0
    %814 = vmatpush.msra.mxu0 0.0
    %815 = vmatpush.msra.mxu0 0.0
    %816 = vmatpush.msra.mxu0 0.0
    %817 = vmatpush.msra.mxu0 %v51
    %818 = vmatmul.f32.gmra.mxu0 %v734
    %v819 = vpop.f32.mrf.mxu0
    %v820 = vadd.f32 0.0, %v819
    %821 = vdwg.mxu0
    %822 = vmatpush.msra.mxu0 0.0
    %823 = vmatpush.msra.mxu0 0.0
    %824 = vmatpush.msra.mxu0 0.0
    %825 = vmatpush.msra.mxu0 0.0
    %826 = vmatpush.msra.mxu0 0.0
    %827 = vmatpush.msra.mxu0 0.0
    %828 = vmatpush.msra.mxu0 0.0
    %829 = vmatpush.msra.mxu0 0.0
    %830 = vmatpush.msra.mxu0 0.0
    %831 = vmatpush.msra.mxu0 0.0
    %832 = vmatpush.msra.mxu0 0.0
    %833 = vmatpush.msra.mxu0 0.0
    %834 = vmatpush.msra.mxu0 0.0
    %835 = vmatpush.msra.mxu0 %v54
    %836 = vmatpush.msra.mxu0 %v53
    %837 = vmatpush.msra.mxu0 %v52
    %838 = vmatmul.f32.gmra.mxu0 %v757
    %v839 = vpop.f32.mrf.mxu0
    %v840 = vadd.f32 0.0, %v839
    %841 = vdwg.mxu0
    %842 = vmatpush.msra.mxu0 0.0
    %843 = vmatpush.msra.mxu0 0.0
    %844 = vmatpush.msra.mxu0 0.0
    %845 = vmatpush.msra.mxu0 0.0
    %846 = vmatpush.msra.mxu0 0.0
    %847 = vmatpush.msra.mxu0 0.0
    %848 = vmatpush.msra.mxu0 0.0
    %849 = vmatpush.msra.mxu0 0.0
    %850 = vmatpush.msra.mxu0 0.0
    %851 = vmatpush.msra.mxu0 0.0
    %852 = vmatpush.msra.mxu0 0.0
    %853 = vmatpush.msra.mxu0 0.0
    %854 = vmatpush.msra.mxu0 0.0
    %855 = vmatpush.msra.mxu0 %v54
    %856 = vmatpush.msra.mxu0 %v53
    %857 = vmatpush.msra.mxu0 %v52
    %858 = vmatmul.f32.gmra.mxu0 %v780
    %v859 = vpop.f32.mrf.mxu0
    %v860 = vadd.f32 0.0, %v859
    %861 = vdwg.mxu0
    %v862 = vmul.f32 %v754, %v777
    %v863 = vsel %vm59, %v862, 0.0
    %864 = vadd.xlane.f32.xlu0 %v863
    %v865 = vpop.xlane.xlu0 %864
    %v867 = vsel %vm59, %v754, 0
    %v870 = vsel %vm59, %v800, 0
    %872 = vmatpush.xpose.msra.mxu0 0.0
    %873 = vmatpush.xpose.msra.mxu0 0.0
    %874 = vmatpush.xpose.msra.mxu0 0.0
    %875 = vmatpush.xpose.msra.mxu0 0.0
    %876 = vmatpush.xpose.msra.mxu0 0.0
    %877 = vmatpush.xpose.msra.mxu0 0.0
    %878 = vmatpush.xpose.msra.mxu0 0.0
    %879 = vmatpush.xpose.msra.mxu0 0.0
    %880 = vmatpush.xpose.msra.mxu0 0.0
    %881 = vmatpush.xpose.msra.mxu0 0.0
    %882 = vmatpush.xpose.msra.mxu0 0.0
    %883 = vmatpush.xpose.msra.mxu0 0.0
    %884 = vmatpush.xpose.msra.mxu0 0.0
    %885 = vmatpush.xpose.msra.mxu0 0.0
    %886 = vmatpush.xpose.msra.mxu0 0.0
    %887 = vmatpush.xpose.msra.mxu0 %v870
    %888 = vmatmul.f32.gmra.mxu0 %v867
    %v889 = vpop.f32.mrf.mxu0
    %v890 = vadd.f32 0.0, %v889
    %891 = vdwg.mxu0
    %v892 = vsub.f32 %v890, %v865
    %v893 = vmax.f32 %v892, 0.0
    %v894 = vand.u32 2147483647, %v892
    %v895 = vsub.f32 0.0, %v894
    %v896 = vmul.f32 %v895, 1.442695
    %v897 = vpow.pop %v896
    %v898 = vadd.f32 %v897, 1.0
    %v899 = vlog2.pop %v898
    %v900 = vmul.f32 %v899, 0.6931472
    %v901 = vmul.f32 -0.5, %v897
    %v902 = vadd.f32 %v901, 1.0
    %v903 = vmul.f32 %v902, %v897
    %v904 = vand.u32 2147483647, %v897
    %vm905 = vcmp.lt.f32.partialorder %v904, 0.0004427343
    %v906 = vsel %vm905, %v903, %v900
    %v907 = vadd.f32 %v893, %v906
    %v908 = vsel %vm732, %v907, 0.0
    %909 = vadd.xlane.f32.xlu0 %v908
    %v910 = vpop.xlane.xlu0 %909
    %v911 = vrot.slane %v910, 4
    %v912 = vadd.f32 %v910, %v911
    %v913 = vrot.slane %v912, 2
    %v914 = vadd.f32 %v912, %v913
    %v915 = vrot.slane %v914, 1
    %v916 = vadd.f32 %v914, %v915
    %s917 = vtos %v916
    %v918 = vrcp.pop 64.0
    %v919 = vmul.f32 64.0, %v918
    %v920 = vsub.f32 1.0, %v919
    %v921 = vmul.f32 %v918, %v920
    %v922 = vadd.f32 %v918, %v921
    %vm923 = vweird.f32 %v918
    %v924 = vsel %vm923, %v918, %v922
    %s925 = vtos %v924
    %s926 = smul.f32 %s917, %s925
    %v927 = vmul.f32 %v820, %v820
    %v928 = vsel %vm59, %v927, 0.0
    %929 = vadd.xlane.f32.xlu0 %v928
    %v930 = vpop.xlane.xlu0 %929
    %v931 = vrot.slane %v930, 4
    %v932 = vadd.f32 %v930, %v931
    %v933 = vrot.slane %v932, 2
    %v934 = vadd.f32 %v932, %v933
    %v935 = vrot.slane %v934, 1
    %v936 = vadd.f32 %v934, %v935
    %s937 = vtos %v936
    %v938 = vmul.f32 %v840, %v840
    %v939 = vsel %vm59, %v938, 0.0
    %940 = vadd.xlane.f32.xlu0 %v939
    %v941 = vpop.xlane.xlu0 %940
    %v942 = vrot.slane %v941, 4
    %v943 = vadd.f32 %v941, %v942
    %v944 = vrot.slane %v943, 2
    %v945 = vadd.f32 %v943, %v944
    %v946 = vrot.slane %v945, 1
    %v947 = vadd.f32 %v945, %v946
    %s948 = vtos %v947
    %s949 = sadd.f32 %s937, %s948
    %v950 = vmul.f32 %v860, %v860
    %v951 = vsel %vm59, %v950, 0.0
    %952 = vadd.xlane.f32.xlu0 %v951
    %v953 = vpop.xlane.xlu0 %952
    %v954 = vrot.slane %v953, 4
    %v955 = vadd.f32 %v953, %v954
    %v956 = vrot.slane %v955, 2
    %v957 = vadd.f32 %v955, %v956
    %v958 = vrot.slane %v957, 1
    %v959 = vadd.f32 %v957, %v958
    %s960 = vtos %v959
    %s961 = sadd.f32 %s949, %s960
    %s962 = smul.f32 %s961, 0.5
    %s963 = smul.f32 %s962, 0.0001
    %v964 = vrcp.pop 8.0
    %v965 = vmul.f32 8.0, %v964
    %v966 = vsub.f32 1.0, %v965
    %v967 = vmul.f32 %v964, %v966
    %v968 = vadd.f32 %v964, %v967
    %vm969 = vweird.f32 %v964
    %v970 = vsel %vm969, %v964, %v968
    %s971 = vtos %v970
    %s972 = smul.f32 %s963, %s971
    %s973 = sadd.f32 %s926, %s972
    %s974 = scalar_lea.smem [#allocation3], 0
    %975 = sst [smem:[%s974]] %s973
    %s976 = scalar_lea.smem [#allocation3], 1
    %977 = sst [smem:[%s976]] %s926
    %s978 = scalar_lea.smem [#allocation3], 2
    %979 = sst [smem:[%s978]] %s972
    // Predicated region
    $region62: #{tpu_custom_call.1} parent=1 // pred_check
      _
    $region63: #{tpu_custom_call.1} parent=1 // pred_check_branch
      %981 = sbr.rel (0) target = $region65
    $region64: #{tpu_custom_call.1} parent=1 // pred_region
      %983 = vsyncadd [#allocation4], 0
      %s985 = sshll.u32 %s15, 4
      %s986 = int_to_ptr.hbm [resolvable:$true] %s985
      %988 = dma.smem_to_hbm [#allocation3], 16, %s986, [#allocation4]
    $region65: #{tpu_custom_call.1} parent=1 // pred_fallthru
      _
    // Predicated region
    $region66: #{tpu_custom_call.1} parent=1 // pred_check
      _
    $region67: #{tpu_custom_call.1} parent=1 // pred_check_branch
      %990 = sbr.rel (0) target = $region69
    $region68: #{tpu_custom_call.1} parent=1 // pred_region
      %992 = dma.done [#allocation4], 16
    $region69: #{tpu_custom_call.1} parent=1 // pred_fallthru
      _
    %993 = sfence
    %994 = vsyncpa [#allocation4], 1

</llo_original>
